<compile_context>
chip_gen: v7x
topology: tpu7x:2x2x1
jax: 0.10.0
libtpu: 0.0.40
codegen_flags: <defaults>
</compile_context>

<pallas_src>
import functools

import jax
import jax.numpy as jnp
from jax.experimental import pallas as pl
from jax.experimental.pallas import tpu as pltpu


def _round_up(x, m):
    return ((x + m - 1) // m) * m


# ---------------------------------------------------------------------------
# Pallas kernel (per pixel tile of one batch item):
#     H = leaky( W1[l] @ X + b1[l] )     # feature-extractor 1x1 conv stand-in
#     O = W2[l] @ H + b2[l]              # per-level predictor 1x1 conv
# X is an NCHW-native (C_pad, TILE_P) tile; output is (Cout_pad, TILE_P), i.e.
# channel-major, so the wrapper reshapes straight back to NCHW (no transpose).
# ---------------------------------------------------------------------------
def _fused_head_kernel(lvl_ref, x_ref, w1_ref, b1_ref, w2_ref, b2_ref, o_ref, *,
                       leaky_slope):
    l = lvl_ref[pl.program_id(0)]                  # level of this pixel tile (SMEM scalar)
    x = x_ref[0]                                   # (C_pad, TILE_P) bf16, NCHW-native
    h = jnp.dot(w1_ref[l], x, preferred_element_type=jnp.float32)    # (Hid, TILE_P) f32
    h = h + b1_ref[l]                              # f32 bias (Hid, 1) broadcast over lanes
    h = jnp.where(h > 0, h, jnp.float32(leaky_slope) * h)
    h = h.astype(w2_ref.dtype)                     # back to bf16 for the 2nd MXU pass
    out = jnp.dot(w2_ref[l], h, preferred_element_type=jnp.float32)  # (Cout_pad, TILE_P)
    out = out + b2_ref[l]
    o_ref[0] = out.astype(o_ref.dtype)             # bf16 writeback (halves output bytes)


# ---------------------------------------------------------------------------
# Yolov3Head (synthetic-parameter) implementation
# ---------------------------------------------------------------------------
class Yolov3HeadPallas:
    """JAX/Pallas version of the Yolov3Head forward compute.

    Per level l:
      feat_l = leaky_relu(conv1x1(features[l]))                # feature extractor stand-in
      head_l = conv1x1(feat_l)  with Cout = A*(1 + 4 + C)      # predictor (fused obj/box/cls)
      objectness_l          = head_l[:,        :A   ]          # (N, A,   H, W)
      rpn_box_regression_l  = head_l[:, A      :5A  ]          # (N, 4A,  H, W)
      cls_l                 = head_l[:, 5A     :    ]          # (N, A*C, H, W)
    """
    # TODO(synk): the real build_yolov3_feature_extractors is a Darknet neck with
    # 3x3 convs + upsample/concat between levels; a per-level 1x1 conv + leaky ReLU
    # stand-in is used here so the Pallas hot path (channel matmuls) is exercised.

    def __init__(self, in_channels, head_channels, num_anchors, num_classes, key,
                 compute_dtype=jnp.bfloat16, leaky_slope=0.1, tile_p=128):
        self.num_anchors = num_anchors
        self.num_classes = num_classes
        self.head_channels = head_channels
        self.compute_dtype = compute_dtype
        self.leaky_slope = leaky_slope
        self.tile_p = tile_p
        self.num_levels = len(in_channels)
        self.cout_pred = num_anchors * (1 + 4 + num_classes)

        # Sublane-aligned channel paddings (multiples of 16 keep bf16 packed
        # sublanes dense; the lane axis is the pixel axis, tiled at tile_p=128).
        self.c_pad = _round_up(max(in_channels), 16)
        self.hid_pad = _round_up(head_channels, 16)
        self.cout_pad = _round_up(self.cout_pred, 16)

        # Logical (unpadded) parameters in f32, conv-style (Cout, Cin) layout.
        self.feat_w, self.feat_b, self.pred_w, self.pred_b = [], [], [], []
        keys = jax.random.split(key, 4 * self.num_levels)
        k = iter(keys)
        for cin in in_channels:
            self.feat_w.append(0.05 * jax.random.normal(next(k), (head_channels, cin), jnp.float32))
            self.feat_b.append(0.05 * jax.random.normal(next(k), (head_channels,), jnp.float32))
            self.pred_w.append(0.05 * jax.random.normal(next(k), (self.cout_pred, head_channels), jnp.float32))
            self.pred_b.append(0.05 * jax.random.normal(next(k), (self.cout_pred,), jnp.float32))

        # Zero-padded, level-stacked parameters.  Whole stacks stay VMEM-resident
        # (constant index_maps); weights bf16 for the MXU, biases f32 for the
        # f32 epilogue adds (keeps box-regression precision).
        L = self.num_levels
        w1s = jnp.zeros((L, self.hid_pad, self.c_pad), jnp.float32)
        b1s = jnp.zeros((L, self.hid_pad, 1), jnp.float32)
        w2s = jnp.zeros((L, self.cout_pad, self.hid_pad), jnp.float32)
        b2s = jnp.zeros((L, self.cout_pad, 1), jnp.float32)
        for l, cin in enumerate(in_channels):
            w1s = w1s.at[l, :head_channels, :cin].set(self.feat_w[l])
            b1s = b1s.at[l, :head_channels, 0].set(self.feat_b[l])
            w2s = w2s.at[l, :self.cout_pred, :head_channels].set(self.pred_w[l])
            b2s = b2s.at[l, :self.cout_pred, 0].set(self.pred_b[l])
        self.w1_stack = w1s.astype(compute_dtype)
        self.w2_stack = w2s.astype(compute_dtype)
        self.b1_stack = b1s
        self.b2_stack = b2s

    def __call__(self, images, features, targets=None):
        del images  # TODO(synk): anchor_generator(images, x) not translatable to Pallas.
        tile_p = self.tile_p
        n_batch = features[0].shape[0]
        a = self.num_anchors
        cout = self.cout_pred

        # ---- pack (NCHW-native, no transposes): per level, (N, C, H, W) ->
        # (N, C, H*W) is a free reshape; zero-pad channels to the shared C_pad
        # and pixels to a multiple of tile_p; concatenate levels along the pixel
        # (lane) axis.  Coarse levels contribute only their own tiles.
        x_parts, runs, tile_levels = [], [], []
        offset = 0
        for l, f in enumerate(features):
            nb, c, hh, ww = f.shape
            hw = hh * ww
            p_pad = _round_up(hw, tile_p)
            x3 = f.reshape(nb, c, hw)
            x3 = jnp.pad(x3, ((0, 0), (0, self.c_pad - c), (0, p_pad - hw)))
            x_parts.append(x3)
            runs.append((nb, hh, ww, hw, offset))
            tile_levels.extend([l] * (p_pad // tile_p))
            offset += p_pad
        total_p = offset
        num_tiles = total_p // tile_p
        x_all = jnp.concatenate(x_parts, axis=2).astype(self.compute_dtype)  # (N, C_pad, total_P)
        tile_level_map = jnp.asarray(tile_levels, dtype=jnp.int32)           # (num_tiles,)

        num_levels = self.num_levels
        c_pad, hid_pad, cout_pad = self.c_pad, self.hid_pad, self.cout_pad

        out = pl.pallas_call(
            functools.partial(_fused_head_kernel, leaky_slope=self.leaky_slope),
            out_shape=jax.ShapeDtypeStruct((n_batch, cout_pad, total_p), self.compute_dtype),
            grid_spec=pltpu.PrefetchScalarGridSpec(
                num_scalar_prefetch=1,                 # tile -> level map (SMEM)
                grid=(num_tiles, n_batch),
                in_specs=[
                    # X: pipelined per (pixel-tile, batch) block.
                    pl.BlockSpec((1, c_pad, tile_p), lambda t, b, lvl: (b, 0, t)),
                    # Weight / bias stacks: full arrays, constant index_map ->
                    # DMA'd once, grid-resident in VMEM; level picked in-kernel.
                    pl.BlockSpec((num_levels, hid_pad, c_pad), lambda t, b, lvl: (0, 0, 0)),
                    pl.BlockSpec((num_levels, hid_pad, 1), lambda t, b, lvl: (0, 0, 0)),
                    pl.BlockSpec((num_levels, cout_pad, hid_pad), lambda t, b, lvl: (0, 0, 0)),
                    pl.BlockSpec((num_levels, cout_pad, 1), lambda t, b, lvl: (0, 0, 0)),
                ],
                out_specs=pl.BlockSpec((1, cout_pad, tile_p), lambda t, b, lvl: (b, 0, t)),
            ),
            compiler_params=pltpu.CompilerParams(
                # num_tiles * n_batch identical-cost steps (8 here): even count,
                # independent blocks -> v7x megacore splits with no idle core.
                dimension_semantics=("parallel", "parallel"),
            ),
        )(tile_level_map, x_all, self.w1_stack, self.b1_stack,
          self.w2_stack, self.b2_stack)

        # ---- unpack: slice real channels/pixels back out.  Kernel output is
        # already channel-major, so this reshapes straight to NCHW (no transpose).
        objectness, box_regression, cls = [], [], []
        for (nb, hh, ww, hw, off) in runs:
            head = out[:, :cout, off:off + hw].reshape(nb, cout, hh, ww)
            objectness.append(head[:, :a])
            box_regression.append(head[:, a:5 * a])
            cls.append(head[:, 5 * a:])

        # TODO(synk): anchor_generator / loss_evaluator / box_selector_test (NMS,
        # descending score sort, BoxList plumbing) have no Pallas equivalent.
        return None, (objectness, box_regression, cls), {}


# ---------------------------------------------------------------------------
# Pure-JAX references (correctness checks)
# ---------------------------------------------------------------------------
def _ref_level_f32(x_nchw, w1, b1, w2, b2, leaky_slope):
    """Pure-f32 reference of the PyTorch math (NCHW throughout)."""
    n, c, hh, ww = x_nchw.shape
    x2 = x_nchw.reshape(n, c, hh * ww)
    h = jnp.einsum("oc,ncp->nop", w1, x2) + b1[None, :, None]
    h = jnp.where(h > 0, h, leaky_slope * h)
    o = jnp.einsum("oc,ncp->nop", w2, h) + b2[None, :, None]
    return o.reshape(n, -1, hh, ww)


def _ref_level_bf16(x_nchw, w1, b1, w2, b2, leaky_slope, compute_dtype):
    """Reference replicating the kernel's bf16-operand / f32-accumulate path."""
    n, c, hh, ww = x_nchw.shape
    x2 = x_nchw.reshape(n, c, hh * ww).astype(compute_dtype)
    h = jnp.einsum("oc,ncp->nop", w1.astype(compute_dtype), x2,
                   preferred_element_type=jnp.float32) + b1[None, :, None]
    h = jnp.where(h > 0, h, leaky_slope * h)
    o = jnp.einsum("oc,ncp->nop", w2.astype(compute_dtype), h.astype(compute_dtype),
                   preferred_element_type=jnp.float32) + b2[None, :, None]
    return o.reshape(n, -1, hh, ww)


if __name__ == "__main__":
    key = jax.random.PRNGKey(0)
    k_img, k_f0, k_f1, k_f2, k_par = jax.random.split(key, 5)

    batch = 2
    num_anchors = 3
    num_classes = 20
    in_channels = (16, 32, 64)      # per-level backbone feature channels
    head_channels = 32
    spatial = (16, 8, 4)            # per-level spatial sizes (fine -> coarse)

    images = jax.random.normal(k_img, (batch, 3, 128, 128), jnp.float32)
    features = [
        jax.random.normal(k, (batch, c, s, s), jnp.float32)
        for k, c, s in zip((k_f0, k_f1, k_f2), in_channels, spatial)
    ]

    head = Yolov3HeadPallas(in_channels, head_channels, num_anchors, num_classes, k_par)
    _, (objectness, box_regression, cls), losses = head(images, features)

    for t in objectness + box_regression + cls:
        jax.block_until_ready(t)

    # shape checks (PyTorch NCHW conventions)
    for lvl, s in enumerate(spatial):
        assert objectness[lvl].shape == (batch, num_anchors, s, s)
        assert box_regression[lvl].shape == (batch, 4 * num_anchors, s, s)
        assert cls[lvl].shape == (batch, num_anchors * num_classes, s, s)

    # numeric checks:
    #  (1) vs a reference that replicates the kernel's bf16/f32 dtype path,
    #  (2) vs a pure-f32 reference (guards against bf16 drift, per review).
    for lvl in range(len(features)):
        got = jnp.concatenate([objectness[lvl], box_regression[lvl], cls[lvl]],
                              axis=1).astype(jnp.float32)
        ref_bf = _ref_level_bf16(features[lvl], head.feat_w[lvl], head.feat_b[lvl],
                                 head.pred_w[lvl], head.pred_b[lvl], 0.1,
                                 head.compute_dtype)
        ref_f32 = _ref_level_f32(features[lvl], head.feat_w[lvl], head.feat_b[lvl],
                                 head.pred_w[lvl], head.pred_b[lvl], 0.1)
        assert jnp.allclose(got, ref_bf, atol=5e-3, rtol=2e-2), f"bf16-path mismatch at level {lvl}"
        assert jnp.allclose(got, ref_f32, atol=3e-2, rtol=3e-2), f"f32 drift too large at level {lvl}"

    print("KERNEL_OK")
</pallas_src>

<mosaic_0001>
module attributes {stable_mosaic.version = 11 : i64} {
  func.func @_fused_head_kernel(%arg0: i32, %arg1: i32, %arg2: memref<4xi32, #tpu.memory_space<smem>>, %arg3: memref<1x64x128xbf16, #tpu.memory_space<vmem>>, %arg4: memref<3x32x64xbf16, #tpu.memory_space<vmem>>, %arg5: memref<3x32x1xf32, #tpu.memory_space<vmem>>, %arg6: memref<3x80x32xbf16, #tpu.memory_space<vmem>>, %arg7: memref<3x80x1xf32, #tpu.memory_space<vmem>>, %arg8: memref<1x80x128xbf16, #tpu.memory_space<vmem>>) attributes {dimension_semantics = [#tpu.dimension_semantics<parallel>, #tpu.dimension_semantics<parallel>], iteration_bounds = array<i64: 4, 2>, scalar_prefetch = 1 : i64, scratch_operands = 0 : i64, tpu.core_type = #tpu.core_type<tc>, window_params = [{transform_indices = @transform_0, window_bounds = array<i64: 1, 64, 128>}, {pipeline_mode = #tpu.pipeline_mode<synchronous>, transform_indices = @transform_1, window_bounds = array<i64: 3, 32, 64>}, {pipeline_mode = #tpu.pipeline_mode<synchronous>, transform_indices = @transform_2, window_bounds = array<i64: 3, 32, 1>}, {pipeline_mode = #tpu.pipeline_mode<synchronous>, transform_indices = @transform_3, window_bounds = array<i64: 3, 80, 32>}, {pipeline_mode = #tpu.pipeline_mode<synchronous>, transform_indices = @transform_4, window_bounds = array<i64: 3, 80, 1>}, {transform_indices = @transform_5, window_bounds = array<i64: 1, 80, 128>}]} {
    %0 = arith.index_cast %arg0 : i32 to index
    %1 = memref.load %arg2[%0] : memref<4xi32, #tpu.memory_space<smem>>
    %c0 = arith.constant 0 : index
    %c0_0 = arith.constant 0 : index
    %c0_1 = arith.constant 0 : index
    %2 = vector.load %arg3[%c0, %c0_0, %c0_1] : memref<1x64x128xbf16, #tpu.memory_space<vmem>>, vector<1x64x128xbf16>
    %3 = vector.shape_cast %2 : vector<1x64x128xbf16> to vector<64x128xbf16>
    %4 = arith.index_cast %1 : i32 to index
    %c0_2 = arith.constant 0 : index
    %c0_3 = arith.constant 0 : index
    %5 = vector.load %arg4[%4, %c0_2, %c0_3] : memref<3x32x64xbf16, #tpu.memory_space<vmem>>, vector<1x32x64xbf16>
    %6 = vector.shape_cast %5 : vector<1x32x64xbf16> to vector<32x64xbf16>
    %cst = arith.constant dense<0.000000e+00> : vector<32x128xf32>
    %7 = tpu.matmul %6, %3, %cst {dimension_numbers = #tpu.dot_dimension_numbers<[1], [0], [0], [1], [0, 0, 1, 1], [], []>} : vector<32x64xbf16>, vector<64x128xbf16>, vector<32x128xf32> -> vector<32x128xf32>
    %8 = arith.index_cast %1 : i32 to index
    %c0_4 = arith.constant 0 : index
    %c0_5 = arith.constant 0 : index
    %9 = vector.load %arg5[%8, %c0_4, %c0_5] : memref<3x32x1xf32, #tpu.memory_space<vmem>>, vector<1x32x1xf32>
    %10 = vector.shape_cast %9 : vector<1x32x1xf32> to vector<32x1xf32>
    %11 = vector.broadcast %10 : vector<32x1xf32> to vector<32x128xf32>
    %12 = arith.addf %7, %11 : vector<32x128xf32>
    %cst_6 = arith.constant 0.000000e+00 : f32
    %13 = vector.broadcast %cst_6 : f32 to vector<32x128xf32>
    %14 = arith.cmpf ogt, %12, %13 : vector<32x128xf32>
    %cst_7 = arith.constant 1.000000e-01 : f32
    %15 = vector.broadcast %cst_7 : f32 to vector<32x128xf32>
    %16 = arith.mulf %15, %12 : vector<32x128xf32>
    %17 = arith.select %14, %12, %16 : vector<32x128xi1>, vector<32x128xf32>
    %18 = arith.truncf %17 : vector<32x128xf32> to vector<32x128xbf16>
    %19 = arith.index_cast %1 : i32 to index
    %c0_8 = arith.constant 0 : index
    %c0_9 = arith.constant 0 : index
    %20 = vector.load %arg6[%19, %c0_8, %c0_9] : memref<3x80x32xbf16, #tpu.memory_space<vmem>>, vector<1x80x32xbf16>
    %21 = vector.shape_cast %20 : vector<1x80x32xbf16> to vector<80x32xbf16>
    %cst_10 = arith.constant dense<0.000000e+00> : vector<80x128xf32>
    %22 = tpu.matmul %21, %18, %cst_10 {dimension_numbers = #tpu.dot_dimension_numbers<[1], [0], [0], [1], [0, 0, 1, 1], [], []>} : vector<80x32xbf16>, vector<32x128xbf16>, vector<80x128xf32> -> vector<80x128xf32>
    %23 = arith.index_cast %1 : i32 to index
    %c0_11 = arith.constant 0 : index
    %c0_12 = arith.constant 0 : index
    %24 = vector.load %arg7[%23, %c0_11, %c0_12] : memref<3x80x1xf32, #tpu.memory_space<vmem>>, vector<1x80x1xf32>
    %25 = vector.shape_cast %24 : vector<1x80x1xf32> to vector<80x1xf32>
    %26 = vector.broadcast %25 : vector<80x1xf32> to vector<80x128xf32>
    %27 = arith.addf %22, %26 : vector<80x128xf32>
    %28 = arith.truncf %27 : vector<80x128xf32> to vector<80x128xbf16>
    %c0_13 = arith.constant 0 : index
    %c0_14 = arith.constant 0 : index
    %c0_15 = arith.constant 0 : index
    %29 = vector.load %arg8[%c0_13, %c0_14, %c0_15] : memref<1x80x128xbf16, #tpu.memory_space<vmem>>, vector<1x80x128xbf16>
    %30 = vector.shape_cast %29 : vector<1x80x128xbf16> to vector<80x128xbf16>
    %31 = vector.shape_cast %28 : vector<80x128xbf16> to vector<1x80x128xbf16>
    tpu.vector_store %arg8[%c0_13, %c0_14, %c0_15], %31 {strides = array<i32>} : memref<1x80x128xbf16, #tpu.memory_space<vmem>>, vector<1x80x128xbf16>,
    return
  }
  func.func @transform_0(%arg0: i32, %arg1: i32, %arg2: memref<4xi32, #tpu.memory_space<smem>>) -> (i32, i32, i32) {
    %c0_i32 = arith.constant 0 : i32
    %c0_i32_0 = arith.constant 0 : i32
    return %arg1, %c0_i32, %arg0 : i32, i32, i32
  }
  func.func @transform_1(%arg0: i32, %arg1: i32, %arg2: memref<4xi32, #tpu.memory_space<smem>>) -> (i32, i32, i32) {
    %c0_i32 = arith.constant 0 : i32
    %c0_i32_0 = arith.constant 0 : i32
    %c0_i32_1 = arith.constant 0 : i32
    %c0_i32_2 = arith.constant 0 : i32
    return %c0_i32, %c0_i32_0, %c0_i32_1 : i32, i32, i32
  }
  func.func @transform_2(%arg0: i32, %arg1: i32, %arg2: memref<4xi32, #tpu.memory_space<smem>>) -> (i32, i32, i32) {
    %c0_i32 = arith.constant 0 : i32
    %c0_i32_0 = arith.constant 0 : i32
    %c0_i32_1 = arith.constant 0 : i32
    %c0_i32_2 = arith.constant 0 : i32
    return %c0_i32, %c0_i32_0, %c0_i32_1 : i32, i32, i32
  }
  func.func @transform_3(%arg0: i32, %arg1: i32, %arg2: memref<4xi32, #tpu.memory_space<smem>>) -> (i32, i32, i32) {
    %c0_i32 = arith.constant 0 : i32
    %c0_i32_0 = arith.constant 0 : i32
    %c0_i32_1 = arith.constant 0 : i32
    %c0_i32_2 = arith.constant 0 : i32
    return %c0_i32, %c0_i32_0, %c0_i32_1 : i32, i32, i32
  }
  func.func @transform_4(%arg0: i32, %arg1: i32, %arg2: memref<4xi32, #tpu.memory_space<smem>>) -> (i32, i32, i32) {
    %c0_i32 = arith.constant 0 : i32
    %c0_i32_0 = arith.constant 0 : i32
    %c0_i32_1 = arith.constant 0 : i32
    %c0_i32_2 = arith.constant 0 : i32
    return %c0_i32, %c0_i32_0, %c0_i32_1 : i32, i32, i32
  }
  func.func @transform_5(%arg0: i32, %arg1: i32, %arg2: memref<4xi32, #tpu.memory_space<smem>>) -> (i32, i32, i32) {
    %c0_i32 = arith.constant 0 : i32
    %c0_i32_0 = arith.constant 0 : i32
    return %arg1, %c0_i32, %arg0 : i32, i32, i32
  }
}

</mosaic_0001>

<llo_original>
// kernel: tpu_custom_call.1
$region0: #{tpu_custom_call.1}
  #allocation0 [shape = 'u32[]', space=smem, size = 0x4, offset = 0x4, fixed_abs, tag = 'smem constant byte address 0x4 - core index']
  #allocation1 [shape = 'u32[144,128]{1,0:T(1,128)}', space=vmem, size = 0x12000, scoped, tag = 'internal scratch']
  #allocation2 [shape = 's32[1]{0}', space=sflag, size = 0x4, scoped, tag = 'scoped memory for tpu_custom_call.1']
  #allocation3 [shape = 'u8[512]{0}', space=smem, size = 0x200, scoped, tag = 'prefetched SMEM operand 0']
  %s0 = inlined_call_operand.vmem [shape: s32[4], index: 0, kind: input, shape index: {}]
  %s1 = inlined_call_operand.vmem [shape: bf16[2,64,512], index: 1, kind: input, shape index: {}]
  %s2 = inlined_call_operand.vmem [shape: bf16[3,32,64], index: 2, kind: input, shape index: {}]
  %s3 = inlined_call_operand.vmem [shape: f32[3,32,1], index: 3, kind: input, shape index: {}]
  %s4 = inlined_call_operand.vmem [shape: bf16[3,80,32], index: 4, kind: input, shape index: {}]
  %s5 = inlined_call_operand.vmem [shape: f32[3,80,1], index: 5, kind: input, shape index: {}]
  %s6 = inlined_call_operand.hbm [shape: bf16[2,80,512], index: 6, kind: output, shape index: {}]
  %s7 = sld [smem:[#allocation0]]
  $region94: #{tpu_custom_call.1} parent=0
    _
  %s9 = ssub.s32 1, %s7
  %s10 = scalar_select 0, %s9, %s7
  %s11 = sshll.u32 %s0, 4
  %s12 = int_to_ptr.vmem [resolvable:$true] %s11
  %14 = dma.vmem_to_smem %s12, 16, [#allocation3], [#allocation2]
  %15 = dma.done [#allocation2], 16
  %16 = sfence
  $region1: #{tpu_custom_call.1} parent=0
    #allocation4 [shape = 'u8[32768]{0}', space=vmem, size = 0x8000, scoped, tag = 'input window, operand 1']
    #allocation5 [shape = 'u8[40960]{0}', space=vmem, size = 0xa000, scoped, tag = 'output window, operand 0']
    #allocation6 [shape = 's32[2]{0}', space=sflag, size = 0x8, scoped, tag = 'scoped memory for tpu_custom_call.1']
    %17 = vsyncpa [#allocation6], 0
    %s18 = scalar_lea.sflag [#allocation6], 1
    %19 = vsyncpa %s18, 0
    loop: start=0, step=1, limit=10
    $region2: #{tpu_custom_call.1} parent=1 // loop_pre_header
      _
    $region3: #{tpu_custom_call.1} parent=1 // loop_header
      %s21 = sphi 0, %s25
      %p22 = scmp.ge.s32.totalorder %s21, 10
      %s28 = sphi 0, %s40
      %s29 = sphi 0, %s36
      %s30 = sphi 0, %s28
      %s31 = sphi 0, %s29
      %s32 = sphi 0, %s30
      %s33 = sphi 0, %s31
      %s45 = sphi 0, %s47
      %s48 = sphi 0, %s45
      %s49 = sphi 0, %s48
      %s65 = sphi 0, %s49
      %s69 = sphi 0, %s69
      %s71 = sphi 0, %s69
      %s72 = sphi 0, %s71
      %s86 = sphi 0, %s72
      %s90 = sphi 0, %s90
      %s92 = sphi 0, %s90
      %s93 = sphi 0, %s92
      %s107 = sphi 0, %s93
      %s111 = sphi 0, %s111
      %s113 = sphi 0, %s111
      %s114 = sphi 0, %s113
      %s128 = sphi 0, %s114
      %s132 = sphi 0, %s132
      %s134 = sphi 0, %s132
      %s135 = sphi 0, %s134
      %s149 = sphi 0, %s135
      %s157 = sphi 0, %s159
      %s160 = sphi 0, %s157
      %s161 = sphi 0, %s160
      %s177 = sphi 0, %s161
    $region4: #{tpu_custom_call.1} parent=1 // loop_header_branch
      %24 = sbr.rel (%p22) target = $region8
    $region5: #{tpu_custom_call.1} parent=1 // loop_body
      %s26 = ssub.s32 %s21, 1
      %s27 = ssub.s32 %s21, 2
      %s34 = sadd.s32 1, %s29
      %p35 = scmp.ge.s32.totalorder %s34, 2
      %s36 = scalar_select %p35, 0, %s34
      %s37 = sadd.s32 1, %s28
      %s38 = scalar_select %p35, %s37, %s28
      %p39 = scmp.ge.s32.totalorder %s38, 4
      %s40 = scalar_select %p39, 0, %s38
      %s41 = ssub.s32 %s29, %s36
      %s42 = ssub.s32 %s28, %s40
      %s43 = sor.u32 %s41, %s42
      %p44 = scmp.eq.s32.totalorder %s43, 0
      %s46 = sadd.s32 %s45, 1
      %s47 = scalar_select %p44, %s45, %s46
      %p50 = pneg %p44
      %p51 = scmp.eq.s32.totalorder %s21, 7
      %p52 = por %p50, %p51
      %p53 = scmp.ne.s32.totalorder %s45, %s48
      %p54 = scmp.eq.s32.totalorder %s21, 0
      %p55 = por %p53, %p54
      %p56 = scmp.ne.s32.totalorder %s45, %s48
      %p57 = scmp.eq.s32.totalorder %s26, 7
      %p58 = por %p56, %p57
      %p59 = scmp.ne.s32.totalorder %s48, %s49
      %p60 = scmp.eq.s32.totalorder %s26, 0
      %p61 = por %p59, %p60
      %p62 = scmp.ne.s32.totalorder %s48, %s49
      %p63 = scmp.eq.s32.totalorder %s27, 7
      %p64 = por %p62, %p63
      %p66 = scmp.ne.s32.totalorder %s49, %s65
      %p67 = scmp.eq.s32.totalorder %s27, 0
      %p68 = por %p66, %p67
      %s70 = sadd.s32 %s69, 1
      %p73 = scmp.eq.s32.totalorder %s21, 7
      %p74 = scmp.ne.s32.totalorder %s69, %s71
      %p75 = scmp.eq.s32.totalorder %s21, 0
      %p76 = por %p74, %p75
      %p77 = scmp.ne.s32.totalorder %s69, %s71
      %p78 = scmp.eq.s32.totalorder %s26, 7
      %p79 = por %p77, %p78
      %p80 = scmp.ne.s32.totalorder %s71, %s72
      %p81 = scmp.eq.s32.totalorder %s26, 0
      %p82 = por %p80, %p81
      %p83 = scmp.ne.s32.totalorder %s71, %s72
      %p84 = scmp.eq.s32.totalorder %s27, 7
      %p85 = por %p83, %p84
      %p87 = scmp.ne.s32.totalorder %s72, %s86
      %p88 = scmp.eq.s32.totalorder %s27, 0
      %p89 = por %p87, %p88
      %s91 = sadd.s32 %s90, 1
      %p94 = scmp.eq.s32.totalorder %s21, 7
      %p95 = scmp.ne.s32.totalorder %s90, %s92
      %p96 = scmp.eq.s32.totalorder %s21, 0
      %p97 = por %p95, %p96
      %p98 = scmp.ne.s32.totalorder %s90, %s92
      %p99 = scmp.eq.s32.totalorder %s26, 7
      %p100 = por %p98, %p99
      %p101 = scmp.ne.s32.totalorder %s92, %s93
      %p102 = scmp.eq.s32.totalorder %s26, 0
      %p103 = por %p101, %p102
      %p104 = scmp.ne.s32.totalorder %s92, %s93
      %p105 = scmp.eq.s32.totalorder %s27, 7
      %p106 = por %p104, %p105
      %p108 = scmp.ne.s32.totalorder %s93, %s107
      %p109 = scmp.eq.s32.totalorder %s27, 0
      %p110 = por %p108, %p109
      %s112 = sadd.s32 %s111, 1
      %p115 = scmp.eq.s32.totalorder %s21, 7
      %p116 = scmp.ne.s32.totalorder %s111, %s113
      %p117 = scmp.eq.s32.totalorder %s21, 0
      %p118 = por %p116, %p117
      %p119 = scmp.ne.s32.totalorder %s111, %s113
      %p120 = scmp.eq.s32.totalorder %s26, 7
      %p121 = por %p119, %p120
      %p122 = scmp.ne.s32.totalorder %s113, %s114
      %p123 = scmp.eq.s32.totalorder %s26, 0
      %p124 = por %p122, %p123
      %p125 = scmp.ne.s32.totalorder %s113, %s114
      %p126 = scmp.eq.s32.totalorder %s27, 7
      %p127 = por %p125, %p126
      %p129 = scmp.ne.s32.totalorder %s114, %s128
      %p130 = scmp.eq.s32.totalorder %s27, 0
      %p131 = por %p129, %p130
      %s133 = sadd.s32 %s132, 1
      %p136 = scmp.eq.s32.totalorder %s21, 7
      %p137 = scmp.ne.s32.totalorder %s132, %s134
      %p138 = scmp.eq.s32.totalorder %s21, 0
      %p139 = por %p137, %p138
      %p140 = scmp.ne.s32.totalorder %s132, %s134
      %p141 = scmp.eq.s32.totalorder %s26, 7
      %p142 = por %p140, %p141
      %p143 = scmp.ne.s32.totalorder %s134, %s135
      %p144 = scmp.eq.s32.totalorder %s26, 0
      %p145 = por %p143, %p144
      %p146 = scmp.ne.s32.totalorder %s134, %s135
      %p147 = scmp.eq.s32.totalorder %s27, 7
      %p148 = por %p146, %p147
      %p150 = scmp.ne.s32.totalorder %s135, %s149
      %p151 = scmp.eq.s32.totalorder %s27, 0
      %p152 = por %p150, %p151
      %s153 = ssub.s32 %s29, %s36
      %s154 = ssub.s32 %s28, %s40
      %s155 = sor.u32 %s153, %s154
      %p156 = scmp.eq.s32.totalorder %s155, 0
      %s158 = sadd.s32 %s157, 1
      %s159 = scalar_select %p156, %s157, %s158
      %p162 = pneg %p156
      %p163 = scmp.eq.s32.totalorder %s21, 7
      %p164 = por %p162, %p163
      %p165 = scmp.ne.s32.totalorder %s157, %s160
      %p166 = scmp.eq.s32.totalorder %s21, 0
      %p167 = por %p165, %p166
      %p168 = scmp.ne.s32.totalorder %s157, %s160
      %p169 = scmp.eq.s32.totalorder %s26, 7
      %p170 = por %p168, %p169
      %p171 = scmp.ne.s32.totalorder %s160, %s161
      %p172 = scmp.eq.s32.totalorder %s26, 0
      %p173 = por %p171, %p172
      %p174 = scmp.ne.s32.totalorder %s160, %s161
      %p175 = scmp.eq.s32.totalorder %s27, 7
      %p176 = por %p174, %p175
      %p178 = scmp.ne.s32.totalorder %s161, %s177
      %p179 = scmp.eq.s32.totalorder %s27, 0
      %p180 = por %p178, %p179
      %p181 = scmp.le.s32.totalorder 1, %s21
      %p182 = scmp.lt.s32.totalorder %s21, 9
      %p183 = pnand %p181, %p182
      %p184 = pneg %p183
      // Predicated region
      $region9: #{tpu_custom_call.1} parent=5 // pred_check
        _
      $region10: #{tpu_custom_call.1} parent=5 // pred_check_branch
        %186 = sbr.rel (%p183) target = $region12
      $region11: #{tpu_custom_call.1} parent=5 // pred_region
        %s187 = ssub.s32 %s21, 1
        // Predicated region
        $region13: #{tpu_custom_call.1} parent=11 // pred_check
          %p188 = pneg %p82
        $region14: #{tpu_custom_call.1} parent=11 // pred_check_branch
          %190 = sbr.rel (%p188) target = $region16
        $region15: #{tpu_custom_call.1} parent=11 // pred_region
          _
        $region16: #{tpu_custom_call.1} parent=11 // pred_fallthru
          _
        // Predicated region
        $region17: #{tpu_custom_call.1} parent=11 // pred_check
          %p191 = pneg %p103
        $region18: #{tpu_custom_call.1} parent=11 // pred_check_branch
          %193 = sbr.rel (%p191) target = $region20
        $region19: #{tpu_custom_call.1} parent=11 // pred_region
          _
        $region20: #{tpu_custom_call.1} parent=11 // pred_fallthru
          _
        // Predicated region
        $region21: #{tpu_custom_call.1} parent=11 // pred_check
          %p194 = pneg %p124
        $region22: #{tpu_custom_call.1} parent=11 // pred_check_branch
          %196 = sbr.rel (%p194) target = $region24
        $region23: #{tpu_custom_call.1} parent=11 // pred_region
          _
        $region24: #{tpu_custom_call.1} parent=11 // pred_fallthru
          _
        // Predicated region
        $region25: #{tpu_custom_call.1} parent=11 // pred_check
          %p197 = pneg %p145
        $region26: #{tpu_custom_call.1} parent=11 // pred_check_branch
          %199 = sbr.rel (%p197) target = $region28
        $region27: #{tpu_custom_call.1} parent=11 // pred_region
          _
        $region28: #{tpu_custom_call.1} parent=11 // pred_fallthru
          _
      $region12: #{tpu_custom_call.1} parent=5 // pred_fallthru
        _
      %p200 = scmp.lt.s32.totalorder %s21, 8
      // Predicated region
      $region29: #{tpu_custom_call.1} parent=5 // pred_check
        %p201 = pneg %p200
      $region30: #{tpu_custom_call.1} parent=5 // pred_check_branch
        %203 = sbr.rel (%p201) target = $region32
      $region31: #{tpu_custom_call.1} parent=5 // pred_region
        // Predicated region
        $region33: #{tpu_custom_call.1} parent=31 // pred_check
          %p204 = pneg %p55
        $region34: #{tpu_custom_call.1} parent=31 // pred_check_branch
          %206 = sbr.rel (%p204) target = $region36
        $region35: #{tpu_custom_call.1} parent=31 // pred_region
          %s207 = sand.u32 %s45, 1
          %s208 = sand.u32 %s45, 1
          %s209 = smul.addr %s208, 32
          %s210 = scalar_lea.vmem [#allocation4], %s209
          %s211 = smul.addr %s29, 32
          %s212 = sadd.s32 %s28, %s211
          %s213 = smul.addr %s212, 4
          %s214 = scalar_lea.vmem %s1, %s213
          // Predicated region
          $region37: #{tpu_custom_call.1} parent=35 // pred_check
            _
          $region38: #{tpu_custom_call.1} parent=35 // pred_check_branch
            %216 = sbr.rel (0) target = $region40
          $region39: #{tpu_custom_call.1} parent=35 // pred_region
            // Predicated region
            $region41: #{tpu_custom_call.1} parent=39 // pred_check
              _
            $region42: #{tpu_custom_call.1} parent=39 // pred_check_branch
              %218 = sbr.rel target = $region44
            $region43: #{tpu_custom_call.1} parent=39 // pred_region
              // Predicated region
              $region56: #{tpu_custom_call.1} parent=43 // pred_check
                _
              $region57: #{tpu_custom_call.1} parent=43 // pred_check_branch
                %247 = sbr.rel (0) target = $region59
              $region58: #{tpu_custom_call.1} parent=43 // pred_region
                loop: start=0, step=1, limit=1
                $region60: #{tpu_custom_call.1} parent=58 // loop_pre_header
                  _
                $region61: #{tpu_custom_call.1} parent=58 // loop_header
                  %s249 = sphi 0, %s253
                  %p250 = scmp.ge.s32.totalorder %s249, 1
                  %s254 = sphi %s214, %s214
                  %s255 = sphi %s210, %s210
                $region62: #{tpu_custom_call.1} parent=58 // loop_header_branch
                  %252 = sbr.rel (%p250) target = $region66
                $region63: #{tpu_custom_call.1} parent=58 // loop_body
                  _
                $region64: #{tpu_custom_call.1} parent=58 // loop_footer
                  %s253 = sadd.s32 1, %s249
                $region65: #{tpu_custom_call.1} parent=58 // loop_footer_branch
                  %248 = sbr.rel target = $region61
                $region66: #{tpu_custom_call.1} parent=58 // loop_exit
                  _
                loop: start=0, step=1, limit=1
                $region67: #{tpu_custom_call.1} parent=58 // loop_pre_header
                  _
                $region68: #{tpu_custom_call.1} parent=58 // loop_header
                  %s258 = sphi 0, %s262
                  %p259 = scmp.ge.s32.totalorder %s258, 1
                  %s263 = sphi %s214, %s214
                  %s264 = sphi %s210, %s210
                $region69: #{tpu_custom_call.1} parent=58 // loop_header_branch
                  %261 = sbr.rel (%p259) target = $region73
                $region70: #{tpu_custom_call.1} parent=58 // loop_body
                  %v265 = vld [vmem:[%s263] sm:$0xf]
                  %266 = vst [vmem:[%s264] sm:$0xf] %v265
                  %v267 = vld [vmem:[%s263 + $0x10] sm:$0xf]
                  %268 = vst [vmem:[%s264 + $0x4] sm:$0xf] %v267
                  %v269 = vld [vmem:[%s263 + $0x20] sm:$0xf]
                  %270 = vst [vmem:[%s264 + $0x8] sm:$0xf] %v269
                  %v271 = vld [vmem:[%s263 + $0x30] sm:$0xf]
                  %272 = vst [vmem:[%s264 + $0xc] sm:$0xf] %v271
                  %v273 = vld [vmem:[%s263 + $0x40] sm:$0xf]
                  %274 = vst [vmem:[%s264 + $0x10] sm:$0xf] %v273
                  %v275 = vld [vmem:[%s263 + $0x50] sm:$0xf]
                  %276 = vst [vmem:[%s264 + $0x14] sm:$0xf] %v275
                  %v277 = vld [vmem:[%s263 + $0x60] sm:$0xf]
                  %278 = vst [vmem:[%s264 + $0x18] sm:$0xf] %v277
                  %v279 = vld [vmem:[%s263 + $0x70] sm:$0xf]
                  %280 = vst [vmem:[%s264 + $0x1c] sm:$0xf] %v279
                $region71: #{tpu_custom_call.1} parent=58 // loop_footer
                  %s262 = sadd.s32 1, %s258
                $region72: #{tpu_custom_call.1} parent=58 // loop_footer_branch
                  %257 = sbr.rel target = $region68
                $region73: #{tpu_custom_call.1} parent=58 // loop_exit
                  _
              $region59: #{tpu_custom_call.1} parent=43 // pred_fallthru
                _
            $region44: #{tpu_custom_call.1} parent=39 // pred_fallthru
              _
            // Predicated region
            $region45: #{tpu_custom_call.1} parent=39 // pred_check
              _
            $region46: #{tpu_custom_call.1} parent=39 // pred_check_branch
              %220 = sbr.rel (0) target = $region48
            $region47: #{tpu_custom_call.1} parent=39 // pred_region
              loop: start=0, step=1, limit=1
              $region49: #{tpu_custom_call.1} parent=47 // loop_pre_header
                _
              $region50: #{tpu_custom_call.1} parent=47 // loop_header
                %s223 = sphi 0, %s227
                %p224 = scmp.ge.s32.totalorder %s223, 1
                %s228 = sphi %s214, %s214
                %s229 = sphi %s210, %s210
              $region51: #{tpu_custom_call.1} parent=47 // loop_header_branch
                %226 = sbr.rel (%p224) target = $region55
              $region52: #{tpu_custom_call.1} parent=47 // loop_body
                %v230 = vld [vmem:[%s228] sm:$0xf]
                %231 = vst [vmem:[%s229] sm:$0xf] %v230
                %v232 = vld [vmem:[%s228 + $0x10] sm:$0xf]
                %233 = vst [vmem:[%s229 + $0x4] sm:$0xf] %v232
                %v234 = vld [vmem:[%s228 + $0x20] sm:$0xf]
                %235 = vst [vmem:[%s229 + $0x8] sm:$0xf] %v234
                %v236 = vld [vmem:[%s228 + $0x30] sm:$0xf]
                %237 = vst [vmem:[%s229 + $0xc] sm:$0xf] %v236
                %v238 = vld [vmem:[%s228 + $0x40] sm:$0xf]
                %239 = vst [vmem:[%s229 + $0x10] sm:$0xf] %v238
                %v240 = vld [vmem:[%s228 + $0x50] sm:$0xf]
                %241 = vst [vmem:[%s229 + $0x14] sm:$0xf] %v240
                %v242 = vld [vmem:[%s228 + $0x60] sm:$0xf]
                %243 = vst [vmem:[%s229 + $0x18] sm:$0xf] %v242
                %v244 = vld [vmem:[%s228 + $0x70] sm:$0xf]
                %245 = vst [vmem:[%s229 + $0x1c] sm:$0xf] %v244
              $region53: #{tpu_custom_call.1} parent=47 // loop_footer
                %s227 = sadd.s32 1, %s223
              $region54: #{tpu_custom_call.1} parent=47 // loop_footer_branch
                %222 = sbr.rel target = $region50
              $region55: #{tpu_custom_call.1} parent=47 // loop_exit
                _
            $region48: #{tpu_custom_call.1} parent=39 // pred_fallthru
              _
          $region40: #{tpu_custom_call.1} parent=35 // pred_fallthru
            _
          %281 = vnop
        $region36: #{tpu_custom_call.1} parent=31 // pred_fallthru
          _
      $region32: #{tpu_custom_call.1} parent=5 // pred_fallthru
        _
      %p282 = scmp.le.s32.totalorder 1, %s21
      %p283 = scmp.lt.s32.totalorder %s21, 9
      %p284 = pnand %p282, %p283
      %p285 = pneg %p284
      // Predicated region
      $region74: #{tpu_custom_call.1} parent=5 // pred_check
        _
      $region75: #{tpu_custom_call.1} parent=5 // pred_check_branch
        %287 = sbr.rel (%p284) target = $region77
      $region76: #{tpu_custom_call.1} parent=5 // pred_region
        %s288 = ssub.s32 %s21, 1
        %s289 = sand.u32 %s48, 1
        %s290 = sand.u32 %s48, 1
        %s291 = smul.addr %s290, 32
        %s292 = scalar_lea.vmem [#allocation4], %s291
        // Predicated region
        $region78: #{tpu_custom_call.1} parent=76 // pred_check
          %p293 = pneg %p61
        $region79: #{tpu_custom_call.1} parent=76 // pred_check_branch
          %295 = sbr.rel (%p293) target = $region81
        $region80: #{tpu_custom_call.1} parent=76 // pred_region
          _
        $region81: #{tpu_custom_call.1} parent=76 // pred_fallthru
          _
        %s296 = sand.u32 %s48, 1
        %s297 = sand.u32 %s48, 1
        %s298 = smul.addr %s297, 32
        %s299 = scalar_lea.vmem [#allocation4], %s298
        %p300 = pneg %p61
        %p301 = pneg %p58
        %p302 = pneg %p82
        %p303 = pneg %p79
        %p304 = pneg %p103
        %p305 = pneg %p100
        %p306 = pneg %p124
        %p307 = pneg %p121
        %p308 = pneg %p145
        %p309 = pneg %p142
        %p310 = pneg %p173
        %p311 = pneg %p170
        %s312 = sand.u32 %s160, 1
        %s313 = scalar_lea.sflag [#allocation6], %s312
        %s314 = sand.u32 %s160, 1
        %s315 = smul.addr %s314, 40
        %s316 = scalar_lea.vmem [#allocation5], %s315
        %s318 = sld [smem:[#allocation3 + %s30]]
        %v319 = vld [vmem:[%s292] sm:$0xf]
        %v320 = vld [vmem:[%s292 + $0x4] sm:$0xf]
        %v321 = vld [vmem:[%s292 + $0x8] sm:$0xf]
        %v322 = vld [vmem:[%s292 + $0xc] sm:$0xf]
        %v323 = vld [vmem:[%s292 + $0x10] sm:$0xf]
        %v324 = vld [vmem:[%s292 + $0x14] sm:$0xf]
        %v325 = vld [vmem:[%s292 + $0x18] sm:$0xf]
        %v326 = vld [vmem:[%s292 + $0x1c] sm:$0xf]
        %s327 = smul.u32 %s318, 4
        %s328 = smul.addr %s327, 4
        %s329 = scalar_lea.vmem %s2, %s328
        %v330 = vld [vmem:[%s329] sm:$0xf]
        %v331 = vld [vmem:[%s329 + $0x4] sm:$0xf]
        %v332 = vld [vmem:[%s329 + $0x8] sm:$0xf]
        %v333 = vld [vmem:[%s329 + $0xc] sm:$0xf]
        %s334 = smul.u32 %s318, 32
        %s335 = scalar_lea.vmem %s3, %s334
        %v336 = vld [vmem:[%s335] sm:$0xff]
        %v337 = vld [vmem:[%s335 + $0x8] sm:$0xff]
        %v338 = vld [vmem:[%s335 + $0x10] sm:$0xff]
        %v339 = vld [vmem:[%s335 + $0x18] sm:$0xff]
        %341 = vset.pattern.permute.xlu0 0
        %342 = vperm.xlu0 %341, %v336
        %v343 = vpop.permute.xlu0 %342
        %346 = vset.pattern.permute.xlu0 0
        %347 = vperm.xlu0 %346, %v337
        %v348 = vpop.permute.xlu0 %347
        %351 = vset.pattern.permute.xlu0 0
        %352 = vperm.xlu0 %351, %v338
        %v353 = vpop.permute.xlu0 %352
        %356 = vset.pattern.permute.xlu0 0
        %357 = vperm.xlu0 %356, %v339
        %v358 = vpop.permute.xlu0 %357
        %v364 = vunpack.c.l.b16 %v330
        %v365 = vunpack.c.l.b16 %v331
        %v366 = vunpack.c.l.b16 %v332
        %v367 = vunpack.c.l.b16 %v333
        %v368 = vpack.c.b16 %v365, %v364
        %v369 = vpack.c.b16 %v367, %v366
        %v378 = vunpack.c.l.b16 %v319
        %v379 = vunpack.c.l.b16 %v320
        %v380 = vunpack.c.l.b16 %v321
        %v381 = vunpack.c.l.b16 %v322
        %v382 = vunpack.c.l.b16 %v323
        %v383 = vunpack.c.l.b16 %v324
        %v384 = vunpack.c.l.b16 %v325
        %v385 = vunpack.c.l.b16 %v326
        %v386 = vpack.c.b16 %v379, %v378
        %v387 = vpack.c.b16 %v381, %v380
        %v388 = vpack.c.b16 %v383, %v382
        %v389 = vpack.c.b16 %v385, %v384
        %vm394 = vcmask 523264
        %v396 = vsel %vm394, %v368, 0
        %v399 = vsel %vm394, %v369, 0
        %401 = vmatprep.subr.bf16.mxu0 0
        %402 = vmatpush1.bf16.msra.mxu0 %v386
        %403 = vmatprep.subr.bf16.mxu0 0
        %404 = vmatpush1.bf16.msra.mxu0 %v387
        %405 = vmatprep.subr.bf16.mxu0 0
        %406 = vmatpush1.bf16.msra.mxu0 %v388
        %407 = vmatprep.subr.bf16.mxu0 0
        %408 = vmatpush1.bf16.msra.mxu0 %v389
        %409 = vmatprep.subr.bf16.mxu0 0
        %410 = vmatpush1.bf16.msra.mxu0 0
        %411 = vmatprep.subr.bf16.mxu0 0
        %412 = vmatpush1.bf16.msra.mxu0 0
        %413 = vmatprep.subr.bf16.mxu0 0
        %414 = vmatpush1.bf16.msra.mxu0 0
        %415 = vmatprep.subr.bf16.mxu0 0
        %416 = vmatpush1.bf16.msra.mxu0 0
        %417 = vmatprep.subr.bf16.mxu0 0
        %418 = vmatpush1.bf16.msra.mxu0 0
        %419 = vmatprep.subr.bf16.mxu0 0
        %420 = vmatpush1.bf16.msra.mxu0 0
        %421 = vmatprep.subr.bf16.mxu0 0
        %422 = vmatpush1.bf16.msra.mxu0 0
        %423 = vmatprep.subr.bf16.mxu0 0
        %424 = vmatpush1.bf16.msra.mxu0 0
        %425 = vmatprep.subr.bf16.mxu0 0
        %426 = vmatpush1.bf16.msra.mxu0 0
        %427 = vmatprep.subr.bf16.mxu0 0
        %428 = vmatpush1.bf16.msra.mxu0 0
        %429 = vmatprep.subr.bf16.mxu0 0
        %430 = vmatpush1.bf16.msra.mxu0 0
        %431 = vmatprep.subr.bf16.mxu0 0
        %432 = vmatpush1.bf16.msra.mxu0 0
        %433 = vmatprep.mubr.bf16.mxu0 0
        %434 = vmatmul.mubr.bf16.gmra.mrb[0].mxu0 %v396
        %v435 = vpop.f32.mrb[0].mxu0
        %v436 = vadd.f32 %v343, %v435
        %v437 = vpop.f32.mrb[0].mxu0
        %v438 = vpop.f32.mrb[0].mxu0
        %v439 = vadd.f32 %v348, %v438
        %v440 = vpop.f32.mrb[0].mxu0
        %441 = vmatprep.mubr.bf16.mxu0 0
        %442 = vmatmul.mubr.bf16.gmra.mrb[0].mxu0 %v399
        %v443 = vpop.f32.mrb[0].mxu0
        %v444 = vadd.f32 %v353, %v443
        %v445 = vpop.f32.mrb[0].mxu0
        %v446 = vpop.f32.mrb[0].mxu0
        %v447 = vadd.f32 %v358, %v446
        %v448 = vpop.f32.mrb[0].mxu0
        %449 = vdwg.mxu0
        %vm450 = vcmp.gt.f32.partialorder %v436, 0.0
        %vm451 = vcmp.gt.f32.partialorder %v439, 0.0
        %vm452 = vcmp.gt.f32.partialorder %v444, 0.0
        %vm453 = vcmp.gt.f32.partialorder %v447, 0.0
        %v454 = vmul.f32 %v436, 0.1
        %v455 = vmul.f32 %v439, 0.1
        %v456 = vmul.f32 %v444, 0.1
        %v457 = vmul.f32 %v447, 0.1
        %v458 = vsel %vm450, %v436, %v454
        %v459 = vsel %vm451, %v439, %v455
        %v460 = vsel %vm452, %v444, %v456
        %v461 = vsel %vm453, %v447, %v457
        %v462 = vpack.c.bf16 %v459, %v458
        %v463 = vpack.c.bf16 %v461, %v460
        %s464 = smul.u32 %s318, 10
        %s465 = smul.addr %s464, 4
        %s466 = scalar_lea.vmem %s4, %s465
        %v467 = vld [vmem:[%s466] sm:$0xf]
        %v468 = vld [vmem:[%s466 + $0x4] sm:$0xf]
        %v469 = vld [vmem:[%s466 + $0x8] sm:$0xf]
        %v470 = vld [vmem:[%s466 + $0xc] sm:$0xf]
        %v471 = vld [vmem:[%s466 + $0x10] sm:$0xf]
        %v472 = vld [vmem:[%s466 + $0x14] sm:$0xf]
        %v473 = vld [vmem:[%s466 + $0x18] sm:$0xf]
        %v474 = vld [vmem:[%s466 + $0x1c] sm:$0xf]
        %v475 = vld [vmem:[%s466 + $0x20] sm:$0xf]
        %v476 = vld [vmem:[%s466 + $0x24] sm:$0xf]
        %s477 = smul.u32 %s318, 80
        %s478 = scalar_lea.vmem %s5, %s477
        %v479 = vld [vmem:[%s478] sm:$0xff]
        %v480 = vld [vmem:[%s478 + $0x8] sm:$0xff]
        %v481 = vld [vmem:[%s478 + $0x10] sm:$0xff]
        %v482 = vld [vmem:[%s478 + $0x18] sm:$0xff]
        %v483 = vld [vmem:[%s478 + $0x20] sm:$0xff]
        %v484 = vld [vmem:[%s478 + $0x28] sm:$0xff]
        %v485 = vld [vmem:[%s478 + $0x30] sm:$0xff]
        %v486 = vld [vmem:[%s478 + $0x38] sm:$0xff]
        %v487 = vld [vmem:[%s478 + $0x40] sm:$0xff]
        %v488 = vld [vmem:[%s478 + $0x48] sm:$0xff]
        %490 = vset.pattern.permute.xlu0 0
        %491 = vperm.xlu0 %490, %v479
        %v492 = vpop.permute.xlu0 %491
        %495 = vset.pattern.permute.xlu0 0
        %496 = vperm.xlu0 %495, %v480
        %v497 = vpop.permute.xlu0 %496
        %500 = vset.pattern.permute.xlu0 0
        %501 = vperm.xlu0 %500, %v481
        %v502 = vpop.permute.xlu0 %501
        %505 = vset.pattern.permute.xlu0 0
        %506 = vperm.xlu0 %505, %v482
        %v507 = vpop.permute.xlu0 %506
        %510 = vset.pattern.permute.xlu0 0
        %511 = vperm.xlu0 %510, %v483
        %v512 = vpop.permute.xlu0 %511
        %515 = vset.pattern.permute.xlu0 0
        %516 = vperm.xlu0 %515, %v484
        %v517 = vpop.permute.xlu0 %516
        %520 = vset.pattern.permute.xlu0 0
        %521 = vperm.xlu0 %520, %v485
        %v522 = vpop.permute.xlu0 %521
        %525 = vset.pattern.permute.xlu0 0
        %526 = vperm.xlu0 %525, %v486
        %v527 = vpop.permute.xlu0 %526
        %530 = vset.pattern.permute.xlu0 0
        %531 = vperm.xlu0 %530, %v487
        %v532 = vpop.permute.xlu0 %531
        %535 = vset.pattern.permute.xlu0 0
        %536 = vperm.xlu0 %535, %v488
        %v537 = vpop.permute.xlu0 %536
        %v549 = vunpack.c.l.b16 %v467
        %v550 = vunpack.c.l.b16 %v468
        %v551 = vunpack.c.l.b16 %v469
        %v552 = vunpack.c.l.b16 %v470
        %v553 = vunpack.c.l.b16 %v471
        %v554 = vunpack.c.l.b16 %v472
        %v555 = vunpack.c.l.b16 %v473
        %v556 = vunpack.c.l.b16 %v474
        %v557 = vunpack.c.l.b16 %v475
        %v558 = vunpack.c.l.b16 %v476
        %v559 = vpack.c.b16 %v550, %v549
        %v560 = vpack.c.b16 %v552, %v551
        %v561 = vpack.c.b16 %v554, %v553
        %v562 = vpack.c.b16 %v556, %v555
        %v563 = vpack.c.b16 %v558, %v557
        %vm564 = vcmask 261120
        %v566 = vsel %vm564, %v559, 0
        %v569 = vsel %vm564, %v560, 0
        %v572 = vsel %vm564, %v561, 0
        %v575 = vsel %vm564, %v562, 0
        %v578 = vsel %vm564, %v563, 0
        %580 = vmatprep.subr.bf16.mxu0 0
        %581 = vmatpush1.bf16.msra.mxu0 %v462
        %582 = vmatprep.subr.bf16.mxu0 0
        %583 = vmatpush1.bf16.msra.mxu0 %v463
        %584 = vmatprep.subr.bf16.mxu0 0
        %585 = vmatpush1.bf16.msra.mxu0 0
        %586 = vmatprep.subr.bf16.mxu0 0
        %587 = vmatpush1.bf16.msra.mxu0 0
        %588 = vmatprep.subr.bf16.mxu0 0
        %589 = vmatpush1.bf16.msra.mxu0 0
        %590 = vmatprep.subr.bf16.mxu0 0
        %591 = vmatpush1.bf16.msra.mxu0 0
        %592 = vmatprep.subr.bf16.mxu0 0
        %593 = vmatpush1.bf16.msra.mxu0 0
        %594 = vmatprep.subr.bf16.mxu0 0
        %595 = vmatpush1.bf16.msra.mxu0 0
        %596 = vmatprep.subr.bf16.mxu0 0
        %597 = vmatpush1.bf16.msra.mxu0 0
        %598 = vmatprep.subr.bf16.mxu0 0
        %599 = vmatpush1.bf16.msra.mxu0 0
        %600 = vmatprep.subr.bf16.mxu0 0
        %601 = vmatpush1.bf16.msra.mxu0 0
        %602 = vmatprep.subr.bf16.mxu0 0
        %603 = vmatpush1.bf16.msra.mxu0 0
        %604 = vmatprep.subr.bf16.mxu0 0
        %605 = vmatpush1.bf16.msra.mxu0 0
        %606 = vmatprep.subr.bf16.mxu0 0
        %607 = vmatpush1.bf16.msra.mxu0 0
        %608 = vmatprep.subr.bf16.mxu0 0
        %609 = vmatpush1.bf16.msra.mxu0 0
        %610 = vmatprep.subr.bf16.mxu0 0
        %611 = vmatpush1.bf16.msra.mxu0 0
        %612 = vmatprep.mubr.bf16.mxu0 0
        %613 = vmatmul.mubr.bf16.gmra.mrb[0].mxu0 %v566
        %v614 = vpop.f32.mrb[0].mxu0
        %v615 = vadd.f32 %v492, %v614
        %v616 = vpop.f32.mrb[0].mxu0
        %v617 = vpop.f32.mrb[0].mxu0
        %v618 = vadd.f32 %v497, %v617
        %v619 = vpop.f32.mrb[0].mxu0
        %620 = vmatprep.mubr.bf16.mxu0 0
        %621 = vmatmul.mubr.bf16.gmra.mrb[0].mxu0 %v569
        %v622 = vpop.f32.mrb[0].mxu0
        %v623 = vadd.f32 %v502, %v622
        %v624 = vpop.f32.mrb[0].mxu0
        %v625 = vpop.f32.mrb[0].mxu0
        %v626 = vadd.f32 %v507, %v625
        %v627 = vpop.f32.mrb[0].mxu0
        %628 = vmatprep.mubr.bf16.mxu0 0
        %629 = vmatmul.mubr.bf16.gmra.mrb[0].mxu0 %v572
        %v630 = vpop.f32.mrb[0].mxu0
        %v631 = vadd.f32 %v512, %v630
        %v632 = vpop.f32.mrb[0].mxu0
        %v633 = vpop.f32.mrb[0].mxu0
        %v634 = vadd.f32 %v517, %v633
        %v635 = vpop.f32.mrb[0].mxu0
        %636 = vmatprep.mubr.bf16.mxu0 0
        %637 = vmatmul.mubr.bf16.gmra.mrb[0].mxu0 %v575
        %v638 = vpop.f32.mrb[0].mxu0
        %v639 = vadd.f32 %v522, %v638
        %v640 = vpop.f32.mrb[0].mxu0
        %v641 = vpop.f32.mrb[0].mxu0
        %v642 = vadd.f32 %v527, %v641
        %v643 = vpop.f32.mrb[0].mxu0
        %644 = vmatprep.mubr.bf16.mxu0 0
        %645 = vmatmul.mubr.bf16.gmra.mrb[0].mxu0 %v578
        %v646 = vpop.f32.mrb[0].mxu0
        %v647 = vadd.f32 %v532, %v646
        %v648 = vpop.f32.mrb[0].mxu0
        %v649 = vpop.f32.mrb[0].mxu0
        %v650 = vadd.f32 %v537, %v649
        %v651 = vpop.f32.mrb[0].mxu0
        %652 = vdwg.mxu0
        %v653 = vpack.c.bf16 %v618, %v615
        %v654 = vpack.c.bf16 %v626, %v623
        %v655 = vpack.c.bf16 %v634, %v631
        %v656 = vpack.c.bf16 %v642, %v639
        %v657 = vpack.c.bf16 %v650, %v647
        %v663 = vunpack.c.l.b16 %v653
        %v664 = vunpack.c.h.b16 %v653
        %v665 = vunpack.c.l.b16 %v654
        %v666 = vunpack.c.h.b16 %v654
        %v667 = vunpack.c.l.b16 %v655
        %v668 = vunpack.c.h.b16 %v655
        %v669 = vunpack.c.l.b16 %v656
        %v670 = vunpack.c.h.b16 %v656
        %v671 = vunpack.c.l.b16 %v657
        %v672 = vunpack.c.h.b16 %v657
        %v673 = vpack.c.b16 %v663, %v663
        %v674 = vpack.c.b16 %v664, %v664
        %v675 = vpack.c.b16 %v665, %v665
        %v676 = vpack.c.b16 %v666, %v666
        %v677 = vpack.c.b16 %v667, %v667
        %v678 = vpack.c.b16 %v668, %v668
        %v679 = vpack.c.b16 %v669, %v669
        %v680 = vpack.c.b16 %v670, %v670
        %v681 = vpack.c.b16 %v671, %v671
        %v682 = vpack.c.b16 %v672, %v672
        %693 = vst [vmem:[%s316] sm:$0xf] %v673
        %694 = vst [vmem:[%s316 + $0x4] sm:$0xf] %v674
        %695 = vst [vmem:[%s316 + $0x8] sm:$0xf] %v675
        %696 = vst [vmem:[%s316 + $0xc] sm:$0xf] %v676
        %697 = vst [vmem:[%s316 + $0x10] sm:$0xf] %v677
        %698 = vst [vmem:[%s316 + $0x14] sm:$0xf] %v678
        %699 = vst [vmem:[%s316 + $0x18] sm:$0xf] %v679
        %700 = vst [vmem:[%s316 + $0x1c] sm:$0xf] %v680
        %701 = vst [vmem:[%s316 + $0x20] sm:$0xf] %v681
        %702 = vst [vmem:[%s316 + $0x24] sm:$0xf] %v682
        %s703 = sand.u32 %s160, 1
        %s704 = scalar_lea.sflag [#allocation6], %s703
        %s705 = sand.u32 %s160, 1
        %s706 = smul.addr %s705, 40
        %s707 = scalar_lea.vmem [#allocation5], %s706
        // Predicated region
        $region82: #{tpu_custom_call.1} parent=76 // pred_check
          %p708 = pneg %p170
        $region83: #{tpu_custom_call.1} parent=76 // pred_check_branch
          %710 = sbr.rel (%p708) target = $region85
        $region84: #{tpu_custom_call.1} parent=76 // pred_region
          %s712 = ssub.s32 640, 640
          %713 = vsyncadd %s704, %s712
          %s714 = smul.addr %s31, 40
          %s715 = sadd.s32 %s30, %s714
          %s716 = smul.addr %s715, 64
          %s717 = scalar_lea.hbm %s6, %s716
          %s718 = sshll.u32 %s707, 4
          %s719 = int_to_ptr.vmem [resolvable:$true] %s718
          %724 = dma.vmem_to_hbm [thread:$0]  %s719, 640, %s717, %s704, 64, 256, 4
        $region85: #{tpu_custom_call.1} parent=76 // pred_fallthru
          _
      $region77: #{tpu_custom_call.1} parent=5 // pred_fallthru
        _
      %p725 = scmp.le.s32.totalorder 2, %s21
      // Predicated region
      $region86: #{tpu_custom_call.1} parent=5 // pred_check
        %p726 = pneg %p725
      $region87: #{tpu_custom_call.1} parent=5 // pred_check_branch
        %728 = sbr.rel (%p726) target = $region89
      $region88: #{tpu_custom_call.1} parent=5 // pred_region
        %s729 = ssub.s32 %s21, 2
        // Predicated region
        $region90: #{tpu_custom_call.1} parent=88 // pred_check
          %p730 = pneg %p176
        $region91: #{tpu_custom_call.1} parent=88 // pred_check_branch
          %732 = sbr.rel (%p730) target = $region93
        $region92: #{tpu_custom_call.1} parent=88 // pred_region
          %s733 = sand.u32 %s161, 1
          %s734 = scalar_lea.sflag [#allocation6], %s733
          %s735 = sand.u32 %s161, 1
          %s736 = smul.addr %s735, 40
          %s737 = scalar_lea.vmem [#allocation5], %s736
          %738 = dma.done %s734, 640
        $region93: #{tpu_custom_call.1} parent=88 // pred_fallthru
          _
      $region89: #{tpu_custom_call.1} parent=5 // pred_fallthru
        _
    $region6: #{tpu_custom_call.1} parent=1 // loop_footer
      %s25 = sadd.s32 1, %s21
    $region7: #{tpu_custom_call.1} parent=1 // loop_footer_branch
      %20 = sbr.rel target = $region3
    $region8: #{tpu_custom_call.1} parent=1 // loop_exit
      _
    %739 = vsyncpa [#allocation6], 1
    %s740 = scalar_lea.sflag [#allocation6], 1
    %741 = vsyncpa %s740, 1

</llo_original>
